<compile_context>
chip_gen: v5e
topology: v5e:2x2
jax: 0.10.0
libtpu: 0.0.40
codegen_flags: <defaults>
</compile_context>

<pallas_src>
import functools
import math

import jax
import jax.numpy as jnp
from jax import lax
from jax.experimental import pallas as pl
from jax.experimental.pallas import tpu as pltpu


# ---------------------------------------------------------------------------
# Pallas kernel
# ---------------------------------------------------------------------------

def _embeddings_kernel(tok_ref, tab_ref, o_ref, *, scale):
    """out[i, :] = table[tokens[i], :] * sqrt(d_model) for all flattened rows.

    tok_ref: (N,)      int32   token ids, SMEM resident (cheap scalar reads)
    tab_ref: (vocab,D) float32 embedding table, VMEM resident
    o_ref:   (N, D)    float32 output rows, D on the lane axis
    """
    n_rows = o_ref.shape[0]

    def body(i, carry):
        idx = tok_ref[i]                              # scalar id from SMEM
        row = tab_ref[pl.ds(idx, 1), :]               # (1, D) dynamic row slice
        o_ref[pl.ds(i, 1), :] = row * scale           # fused * sqrt(d_model)
        return carry

    lax.fori_loop(0, n_rows, body, None)


# ---------------------------------------------------------------------------
# Wrapper
# ---------------------------------------------------------------------------

def embeddings_forward(emb_table, tokens):
    """nn.Embedding(vocab, d_model, padding_idx=0)(x) * sqrt(d_model).

    emb_table: (vocab, D) float32 (row 0 is zeros for padding_idx=0)
    tokens:    (B, L) int32
    returns:   (B, L, D) float32
    """
    B, L = tokens.shape
    vocab, D = emb_table.shape
    scale = float(math.sqrt(D))

    tok_flat = tokens.astype(jnp.int32).reshape(B * L)   # (N,) ids -> SMEM

    out = pl.pallas_call(
        functools.partial(_embeddings_kernel, scale=scale),
        out_shape=jax.ShapeDtypeStruct((B * L, D), jnp.float32),
        in_specs=[
            pl.BlockSpec(memory_space=pltpu.MemorySpace.SMEM),   # token ids
            pl.BlockSpec(memory_space=pltpu.MemorySpace.VMEM),   # resident table
        ],
        out_specs=pl.BlockSpec(memory_space=pltpu.MemorySpace.VMEM),
    )(tok_flat, emb_table)

    return out.reshape(B, L, D)   # metadata-only reshape outside the kernel


# ---------------------------------------------------------------------------
# Parameters
# ---------------------------------------------------------------------------

def init_embedding(key, vocab, d_model):
    emb = jax.random.normal(key, (vocab, d_model), jnp.float32)
    emb = emb.at[0].set(0.0)   # nn.Embedding(padding_idx=0): row 0 is zeros
    return emb


# ---------------------------------------------------------------------------
# Demo / self-check
# ---------------------------------------------------------------------------

if __name__ == "__main__":
    B, L = 2, 16
    d_model, vocab = 128, 32    # D=128 -> lane-dense output rows

    key = jax.random.PRNGKey(0)
    pkey, tkey = jax.random.split(key)
    emb_table = init_embedding(pkey, vocab, d_model)
    tokens = jax.random.randint(tkey, (B, L), 0, vocab, dtype=jnp.int32)
    tokens = tokens.at[:, 0].set(0)   # exercise padding_idx=0 rows

    out = jax.block_until_ready(embeddings_forward(emb_table, tokens))

    # Reference: lut(x) * sqrt(d_model) in plain JAX.
    ref = emb_table[tokens] * math.sqrt(d_model)
    assert out.shape == (B, L, d_model), out.shape
    assert bool(jnp.allclose(out, ref, rtol=1e-6, atol=1e-6))
    assert bool(jnp.all(out[:, 0, :] == 0.0))   # padding rows stay zero
    print("KERNEL_OK")
</pallas_src>

<mosaic_0001>
module attributes {stable_mosaic.version = 11 : i64} {
  func.func @_embeddings_kernel(%arg0: memref<32xi32, #tpu.memory_space<smem>>, %arg1: memref<32x128xf32, #tpu.memory_space<vmem>>, %arg2: memref<32x128xf32, #tpu.memory_space<vmem>>) attributes {dimension_semantics = [], scalar_prefetch = 0 : i64, scratch_operands = 0 : i64, tpu.core_type = #tpu.core_type<tc>} {
    %c0_i32 = arith.constant 0 : i32
    %c32_i32 = arith.constant 32 : i32
    %0 = arith.addi %c0_i32, %c32_i32 : i32
    %c1_i32 = arith.constant 1 : i32
    scf.for %arg3 = %c0_i32 to %0 step %c1_i32  : i32 {
      %1 = arith.index_cast %arg3 : i32 to index
      %2 = memref.load %arg0[%1] : memref<32xi32, #tpu.memory_space<smem>>
      %3 = arith.index_cast %2 : i32 to index
      %c0 = arith.constant 0 : index
      %4 = vector.load %arg1[%3, %c0] : memref<32x128xf32, #tpu.memory_space<vmem>>, vector<1x128xf32>
      %cst = arith.constant 11.3137083 : f32
      %5 = vector.broadcast %cst : f32 to vector<1x128xf32>
      %6 = arith.mulf %4, %5 : vector<1x128xf32>
      %7 = arith.index_cast %arg3 : i32 to index
      %c0_1 = arith.constant 0 : index
      %8 = vector.load %arg2[%7, %c0_1] : memref<32x128xf32, #tpu.memory_space<vmem>>, vector<1x128xf32>
      tpu.vector_store %arg2[%7, %c0_1], %6 {strides = array<i32>} : memref<32x128xf32, #tpu.memory_space<vmem>>, vector<1x128xf32>,
    }
    %c32_i32_0 = arith.constant 32 : i32
    return
  }
}

</mosaic_0001>

<llo_original>
// kernel: tpu_custom_call.1
$region0: #{tpu_custom_call.1}
  #allocation0 [shape = 'u32[]', space=smem, size = 0x4, offset = 0x4, fixed_abs, tag = 'smem constant byte address 0x4 - core index']
  #allocation1 [shape = 'u32[72,128]{1,0:T(1,128)}', space=vmem, size = 0x9000, scoped, tag = 'internal scratch']
  %s0 = inlined_call_operand.hbm [shape: s32[32], index: 0, kind: input, shape index: {}]
  %s1 = inlined_call_operand.hbm [shape: f32[32,128], index: 1, kind: input, shape index: {}]
  %s2 = inlined_call_operand.hbm [shape: f32[32,128], index: 2, kind: output, shape index: {}]
  %s3 = sld [smem:[#allocation0]]
  $region33: #{tpu_custom_call.1} parent=0
    _
  %s5 = ssub.s32 1, %s3
  %s6 = scalar_select 0, %s5, %s3
  $region1: #{tpu_custom_call.1} parent=0
    #allocation2 [shape = 'u8[512]{0}', space=smem, size = 0x200, scoped, tag = 'input window, operand 0, single buffered']
    #allocation3 [shape = 's32[1]{0}', space=sflag, size = 0x4, scoped, tag = 'scoped memory for tpu_custom_call.1']
    #allocation4 [shape = 's32[1]{0}', space=sflag, size = 0x4, scoped, tag = 'scoped memory for tpu_custom_call.1']
    #allocation5 [shape = 's32[1]{0}', space=sflag, size = 0x4, scoped, tag = 'scoped memory for tpu_custom_call.1']
    #allocation6 [shape = 'u8[16384]{0}', space=vmem, size = 0x4000, scoped, tag = 'input window, operand 1, single buffered']
    #allocation7 [shape = 'u8[16384]{0}', space=vmem, size = 0x4000, scoped, tag = 'output window, operand 0, single buffered']
    %7 = vsyncpa [#allocation5], 0
    %8 = vsyncpa [#allocation3], 0
    %9 = vsyncpa [#allocation4], 0
    // Predicated region
    $region2: #{tpu_custom_call.1} parent=1 // pred_check
      _
    $region3: #{tpu_custom_call.1} parent=1 // pred_check_branch
      %11 = sbr.rel (0) target = $region5
    $region4: #{tpu_custom_call.1} parent=1 // pred_region
      %13 = vsyncadd [#allocation5], 0
      %s15 = sshll.u32 %s0, 4
      %s16 = int_to_ptr.hbm [resolvable:$true] %s15
      %18 = dma.hbm_to_smem %s16, 16, [#allocation2], [#allocation5]
    $region5: #{tpu_custom_call.1} parent=1 // pred_fallthru
      _
    // Predicated region
    $region6: #{tpu_custom_call.1} parent=1 // pred_check
      _
    $region7: #{tpu_custom_call.1} parent=1 // pred_check_branch
      %20 = sbr.rel (0) target = $region9
    $region8: #{tpu_custom_call.1} parent=1 // pred_region
      %22 = vsyncadd [#allocation3], 0
      %s23 = sshll.u32 %s1, 4
      %s24 = int_to_ptr.hbm [resolvable:$true] %s23
      %s25 = sshll.u32 [#allocation6], 4
      %s26 = int_to_ptr.vmem [resolvable:$true] %s25
      %31 = dma.hbm_to_vmem [thread:$0]  %s24, 512, %s26, [#allocation3], 128, 128, 8
    $region9: #{tpu_custom_call.1} parent=1 // pred_fallthru
      _
    // Predicated region
    $region10: #{tpu_custom_call.1} parent=1 // pred_check
      _
    $region11: #{tpu_custom_call.1} parent=1 // pred_check_branch
      %33 = sbr.rel (0) target = $region13
    $region12: #{tpu_custom_call.1} parent=1 // pred_region
      %35 = dma.done [#allocation5], 16
    $region13: #{tpu_custom_call.1} parent=1 // pred_fallthru
      _
    // Predicated region
    $region14: #{tpu_custom_call.1} parent=1 // pred_check
      _
    $region15: #{tpu_custom_call.1} parent=1 // pred_check_branch
      %37 = sbr.rel (0) target = $region17
    $region16: #{tpu_custom_call.1} parent=1 // pred_region
      %39 = dma.done [#allocation3], 512
    $region17: #{tpu_custom_call.1} parent=1 // pred_fallthru
      _
    %40 = sfence
    loop: start=0, step=1, limit=32
    $region18: #{tpu_custom_call.1} parent=1 // loop_pre_header
      _
    $region19: #{tpu_custom_call.1} parent=1 // loop_header
      %s42 = sphi 0, %s46
      %p43 = scmp.ge.s32.totalorder %s42, 32
    $region20: #{tpu_custom_call.1} parent=1 // loop_header_branch
      %45 = sbr.rel (%p43) target = $region24
    $region21: #{tpu_custom_call.1} parent=1 // loop_body
      %s47 = sld [smem:[#allocation2 + %s42]]
      %s48 = scalar_lea.vmem [#allocation6], %s47
      %v49 = vld [vmem:[%s48] sm:$0x1]
      %v50 = vmul.f32 %v49, 11.313708
      %s51 = scalar_lea.vmem [#allocation7], %s42
      %52 = vst [vmem:[%s51] sm:$0x1] %v50
    $region22: #{tpu_custom_call.1} parent=1 // loop_footer
      %s46 = sadd.s32 1, %s42
    $region23: #{tpu_custom_call.1} parent=1 // loop_footer_branch
      %41 = sbr.rel target = $region19
    $region24: #{tpu_custom_call.1} parent=1 // loop_exit
      _
    // Predicated region
    $region25: #{tpu_custom_call.1} parent=1 // pred_check
      _
    $region26: #{tpu_custom_call.1} parent=1 // pred_check_branch
      %54 = sbr.rel (0) target = $region28
    $region27: #{tpu_custom_call.1} parent=1 // pred_region
      %56 = vsyncadd [#allocation4], 0
      %s57 = sshll.u32 [#allocation7], 4
      %s58 = int_to_ptr.vmem [resolvable:$true] %s57
      %s59 = sshll.u32 %s2, 4
      %s60 = int_to_ptr.hbm [resolvable:$true] %s59
      %65 = dma.vmem_to_hbm [thread:$0]  %s58, 512, %s60, [#allocation4], 128, 128, 8
    $region28: #{tpu_custom_call.1} parent=1 // pred_fallthru
      _
    // Predicated region
    $region29: #{tpu_custom_call.1} parent=1 // pred_check
      _
    $region30: #{tpu_custom_call.1} parent=1 // pred_check_branch
      %67 = sbr.rel (0) target = $region32
    $region31: #{tpu_custom_call.1} parent=1 // pred_region
      %69 = dma.done [#allocation4], 512
    $region32: #{tpu_custom_call.1} parent=1 // pred_fallthru
      _
    %70 = vsyncpa [#allocation3], 1
    %71 = vsyncpa [#allocation4], 1
    %72 = vsyncpa [#allocation5], 1

</llo_original>
